<compile_context>
chip_gen: v5e
topology: v5e:2x2
jax: 0.10.0
libtpu: 0.0.40
codegen_flags: <defaults>
</compile_context>

<pallas_src>
import functools
import math

import jax
import jax.numpy as jnp
from jax.experimental import pallas as pl
from jax.experimental.pallas import tpu as pltpu


def _round_up(x, m):
    return ((x + m - 1) // m) * m


def _pick_tile_v(vp, cap):
    """Largest multiple-of-128 divisor of vp that is <= cap (vp is a 128 multiple)."""
    t = max(128, (min(vp, cap) // 128) * 128)
    while vp % t:
        t -= 128
    return t


# ----------------------------- kernels --------------------------------------
# Grid = (row_blocks, vocab_blocks); vocab axis innermost. z (first Linear + tanh) is
# computed once per row block (v == 0) into bf16 VMEM scratch and reused for every
# vocab tile of that row block.


def _joint_add_kernel(hp_ref, he_ref, w1_ref, b1_ref, w2_ref, b2_ref, o_ref, z_ref):
    @pl.when(pl.program_id(1) == 0)
    def _():
        # x = h_pred + h_enc in f32 (VPU), then feed the MXU in bf16.
        x = hp_ref[...].astype(jnp.float32) + he_ref[...].astype(jnp.float32)
        z = jnp.dot(x.astype(jnp.bfloat16), w1_ref[...],
                    preferred_element_type=jnp.float32)            # (Rb, Jp) f32
        z_ref[...] = jnp.tanh(z + b1_ref[...]).astype(jnp.bfloat16)

    y = jnp.dot(z_ref[...], w2_ref[...],
                preferred_element_type=jnp.float32)                 # (Rb, Tv) f32
    o_ref[...] = (y + b2_ref[...]).astype(o_ref.dtype)


def _joint_concat_kernel(hp_ref, he_ref, w1p_ref, w1e_ref, b1_ref, w2_ref, b2_ref,
                         o_ref, z_ref):
    @pl.when(pl.program_id(1) == 0)
    def _():
        # cat([hp, he], -1) @ W1^T == hp @ W1[:, :H]^T + he @ W1[:, H:]^T
        z = (jnp.dot(hp_ref[...].astype(jnp.bfloat16), w1p_ref[...],
                     preferred_element_type=jnp.float32)
             + jnp.dot(he_ref[...].astype(jnp.bfloat16), w1e_ref[...],
                       preferred_element_type=jnp.float32)
             + b1_ref[...])                                         # (Rb, Jp) f32
        z_ref[...] = jnp.tanh(z).astype(jnp.bfloat16)

    y = jnp.dot(z_ref[...], w2_ref[...],
                preferred_element_type=jnp.float32)                 # (Rb, Tv) f32
    o_ref[...] = (y + b2_ref[...]).astype(o_ref.dtype)


# ----------------------------- wrapper ---------------------------------------


@functools.partial(
    jax.jit,
    static_argnames=("joint_method", "vocab_sz", "block_rows", "max_tile_v"))
def joint_forward(h_pred, h_enc, params, *, joint_method, vocab_sz,
                  block_rows=512, max_tile_v=2048):
    assert h_pred.shape == h_enc.shape, (h_pred.shape, h_enc.shape)
    lead = h_pred.shape[:-1]
    H = h_pred.shape[-1]
    N = int(math.prod(lead)) if lead else 1

    hp = h_pred.reshape(N, H)
    he = h_enc.reshape(N, H)

    Jp = params["b1"].shape[-1]          # joint size padded to a multiple of 128
    Vp = params["w2_t"].shape[-1]        # vocab size padded to a multiple of 128

    rb = _round_up(max(8, min(block_rows, _round_up(N, 8))), 8)
    tv = _pick_tile_v(Vp, max_tile_v)
    grid = (pl.cdiv(N, rb), Vp // tv)

    row_spec = pl.BlockSpec((rb, H), lambda i, v: (i, 0))
    out_spec = pl.BlockSpec((rb, tv), lambda i, v: (i, v))
    w1_spec = pl.BlockSpec((H, Jp), lambda i, v: (0, 0))
    b1_spec = pl.BlockSpec((1, Jp), lambda i, v: (0, 0))
    w2_spec = pl.BlockSpec((Jp, tv), lambda i, v: (0, v))
    b2_spec = pl.BlockSpec((1, tv), lambda i, v: (0, v))

    if joint_method == "add":
        kernel = _joint_add_kernel
        args = (hp, he, params["w1_t"], params["b1"], params["w2_t"], params["b2"])
        in_specs = [row_spec, row_spec, w1_spec, b1_spec, w2_spec, b2_spec]
    elif joint_method == "concat":
        kernel = _joint_concat_kernel
        args = (hp, he, params["w1p_t"], params["w1e_t"], params["b1"],
                params["w2_t"], params["b2"])
        in_specs = [row_spec, row_spec, w1_spec, w1_spec, b1_spec, w2_spec, b2_spec]
    else:
        raise ValueError("No such joint_method")

    out = pl.pallas_call(
        kernel,
        out_shape=jax.ShapeDtypeStruct((N, Vp), jnp.float32),
        grid=grid,
        in_specs=in_specs,
        out_specs=out_spec,
        scratch_shapes=[pltpu.VMEM((rb, Jp), jnp.bfloat16)],
        compiler_params=pltpu.CompilerParams(
            dimension_semantics=("parallel", "arbitrary"),
            vmem_limit_bytes=32 * 1024 * 1024),
    )(*args)

    return out[:, :vocab_sz].reshape(*lead, vocab_sz)


# ----------------------------- params ----------------------------------------


def make_torch_params(key, out_sz, joint_sz, vocab_sz, joint_method):
    """Synthetic parameters in PyTorch nn.Linear layout / init bounds (f32)."""
    input_sz = out_sz if joint_method == "add" else 2 * out_sz
    k1, k2, k3, k4 = jax.random.split(key, 4)
    b1_bound = 1.0 / math.sqrt(input_sz)
    b2_bound = 1.0 / math.sqrt(joint_sz)
    return dict(
        w1=jax.random.uniform(k1, (joint_sz, input_sz), jnp.float32,
                              -b1_bound, b1_bound),
        b1=jax.random.uniform(k2, (joint_sz,), jnp.float32, -b1_bound, b1_bound),
        w2=jax.random.uniform(k3, (vocab_sz, joint_sz), jnp.float32,
                              -b2_bound, b2_bound),
        b2=jax.random.uniform(k4, (vocab_sz,), jnp.float32, -b2_bound, b2_bound),
    )


def prepare_params(p, out_sz, joint_method):
    """One-time host-side conversion to kernel layout: transpose, zero-pad J/V to
    multiples of 128 (exact: tanh(0)=0, zero weight rows/cols), bf16 weights,
    f32 biases, split W1 for the concat rewrite."""
    J = p["w1"].shape[0]
    V = p["w2"].shape[0]
    Jp = _round_up(J, 128)
    Vp = _round_up(V, 128)

    w1 = jnp.pad(p["w1"], ((0, Jp - J), (0, 0)))
    b1 = jnp.pad(p["b1"], (0, Jp - J))
    w2 = jnp.pad(p["w2"], ((0, Vp - V), (0, Jp - J)))
    b2 = jnp.pad(p["b2"], (0, Vp - V))

    out = dict(
        b1=b1[None, :].astype(jnp.float32),
        w2_t=w2.T.astype(jnp.bfloat16),          # (Jp, Vp)
        b2=b2[None, :].astype(jnp.float32),
    )
    if joint_method == "add":
        out["w1_t"] = w1.T.astype(jnp.bfloat16)              # (H, Jp)
    elif joint_method == "concat":
        out["w1p_t"] = w1[:, :out_sz].T.astype(jnp.bfloat16)  # (H, Jp) h_pred half
        out["w1e_t"] = w1[:, out_sz:].T.astype(jnp.bfloat16)  # (H, Jp) h_enc half
    else:
        raise ValueError("No such joint_method")
    return out


# ----------------------------- references -------------------------------------


def reference_f32(h_pred, h_enc, p, joint_method):
    """Pure-f32 reference of Joint.forward (PyTorch semantics)."""
    if joint_method == "add":
        x = h_pred + h_enc
    else:
        x = jnp.concatenate([h_pred, h_enc], axis=-1)
    z = jnp.tanh(x @ p["w1"].T + p["b1"])
    return z @ p["w2"].T + p["b2"]


def reference_bf16(h_pred, h_enc, p, joint_method):
    """Reference with the same bf16 MXU-operand casts the kernel performs."""
    bf = jnp.bfloat16
    if joint_method == "add":
        x = (h_pred + h_enc).astype(bf)
    else:
        x = jnp.concatenate([h_pred.astype(bf), h_enc.astype(bf)], axis=-1)
    z = jnp.dot(x, p["w1"].T.astype(bf), preferred_element_type=jnp.float32)
    z = jnp.tanh(z + p["b1"]).astype(bf)
    y = jnp.dot(z, p["w2"].T.astype(bf), preferred_element_type=jnp.float32)
    return y + p["b2"]


# ----------------------------- main -------------------------------------------


if __name__ == "__main__":
    # Small RNN-T-style shapes: batch=2, enc time=8, pred len=8, hidden(out_sz)=32.
    B, T, U = 2, 8, 8
    OUT_SZ, JOINT_SZ, VOCAB_SZ = 32, 64, 128

    key = jax.random.PRNGKey(0)
    k_hp, k_he, k_pa, k_pc = jax.random.split(key, 4)
    h_pred = jax.random.normal(k_hp, (B, T, U, OUT_SZ), dtype=jnp.float32)
    h_enc = jax.random.normal(k_he, (B, T, U, OUT_SZ), dtype=jnp.float32)

    for method, kp in (("add", k_pa), ("concat", k_pc)):
        torch_p = make_torch_params(kp, OUT_SZ, JOINT_SZ, VOCAB_SZ, method)
        kern_p = prepare_params(torch_p, OUT_SZ, method)

        out = jax.block_until_ready(
            joint_forward(h_pred, h_enc, kern_p,
                          joint_method=method, vocab_sz=VOCAB_SZ))
        assert out.shape == (B, T, U, VOCAB_SZ), out.shape

        ref_bf = jax.block_until_ready(reference_bf16(h_pred, h_enc, torch_p, method))
        ref_f32 = jax.block_until_ready(reference_f32(h_pred, h_enc, torch_p, method))

        err_bf = float(jnp.max(jnp.abs(out - ref_bf)))    # same-precision reference
        err_f32 = float(jnp.max(jnp.abs(out - ref_f32)))  # full-f32 PyTorch semantics
        assert err_bf < 5e-3, (method, err_bf)
        assert err_f32 < 1e-1, (method, err_f32)

    print("KERNEL_OK")
</pallas_src>

<mosaic_0001>
module attributes {stable_mosaic.version = 11 : i64} {
  func.func @_joint_add_kernel(%arg0: i32, %arg1: i32, %arg2: memref<128x32xf32, #tpu.memory_space<vmem>>, %arg3: memref<128x32xf32, #tpu.memory_space<vmem>>, %arg4: memref<32x128xbf16, #tpu.memory_space<vmem>>, %arg5: memref<1x128xf32, #tpu.memory_space<vmem>>, %arg6: memref<128x128xbf16, #tpu.memory_space<vmem>>, %arg7: memref<1x128xf32, #tpu.memory_space<vmem>>, %arg8: memref<128x128xf32, #tpu.memory_space<vmem>>, %arg9: memref<128x128xbf16, #tpu.memory_space<vmem>>) attributes {dimension_semantics = [#tpu.dimension_semantics<parallel>, #tpu.dimension_semantics<arbitrary>], iteration_bounds = array<i64: 1, 1>, scalar_prefetch = 0 : i64, scratch_operands = 1 : i64, tpu.core_type = #tpu.core_type<tc>, window_params = [{transform_indices = @transform_0, window_bounds = array<i64: 128, 32>}, {transform_indices = @transform_1, window_bounds = array<i64: 128, 32>}, {pipeline_mode = #tpu.pipeline_mode<synchronous>, transform_indices = @transform_2, window_bounds = array<i64: 32, 128>}, {pipeline_mode = #tpu.pipeline_mode<synchronous>, transform_indices = @transform_3, window_bounds = array<i64: 1, 128>}, {transform_indices = @transform_4, window_bounds = array<i64: 128, 128>}, {transform_indices = @transform_5, window_bounds = array<i64: 1, 128>}, {transform_indices = @transform_6, window_bounds = array<i64: 128, 128>}]} {
    %c0_i32 = arith.constant 0 : i32
    %0 = arith.cmpi eq, %arg1, %c0_i32 : i32
    %1 = arith.extui %0 : i1 to i32
    %c0_i32_0 = arith.constant 0 : i32
    %2 = arith.cmpi ne, %1, %c0_i32_0 : i32
    scf.if %2 {
      %c0_8 = arith.constant 0 : index
      %c0_9 = arith.constant 0 : index
      %10 = vector.load %arg2[%c0_8, %c0_9] : memref<128x32xf32, #tpu.memory_space<vmem>>, vector<128x32xf32>
      %c0_10 = arith.constant 0 : index
      %c0_11 = arith.constant 0 : index
      %11 = vector.load %arg3[%c0_10, %c0_11] : memref<128x32xf32, #tpu.memory_space<vmem>>, vector<128x32xf32>
      %12 = arith.addf %10, %11 : vector<128x32xf32>
      %13 = arith.truncf %12 : vector<128x32xf32> to vector<128x32xbf16>
      %c0_12 = arith.constant 0 : index
      %c0_13 = arith.constant 0 : index
      %14 = vector.load %arg4[%c0_12, %c0_13] : memref<32x128xbf16, #tpu.memory_space<vmem>>, vector<32x128xbf16>
      %cst_14 = arith.constant dense<0.000000e+00> : vector<128x128xf32>
      %15 = tpu.matmul %13, %14, %cst_14 {dimension_numbers = #tpu.dot_dimension_numbers<[1], [0], [0], [1], [0, 0, 1, 1], [], []>} : vector<128x32xbf16>, vector<32x128xbf16>, vector<128x128xf32> -> vector<128x128xf32>
      %c0_15 = arith.constant 0 : index
      %c0_16 = arith.constant 0 : index
      %16 = vector.load %arg5[%c0_15, %c0_16] : memref<1x128xf32, #tpu.memory_space<vmem>>, vector<1x128xf32>
      %17 = vector.broadcast %16 : vector<1x128xf32> to vector<128x128xf32>
      %18 = arith.addf %15, %17 : vector<128x128xf32>
      %19 = math.tanh %18 : vector<128x128xf32>
      %20 = arith.truncf %19 : vector<128x128xf32> to vector<128x128xbf16>
      %c0_17 = arith.constant 0 : index
      %c0_18 = arith.constant 0 : index
      %21 = vector.load %arg9[%c0_17, %c0_18] : memref<128x128xbf16, #tpu.memory_space<vmem>>, vector<128x128xbf16>
      tpu.vector_store %arg9[%c0_17, %c0_18], %20 {strides = array<i32>} : memref<128x128xbf16, #tpu.memory_space<vmem>>, vector<128x128xbf16>,
    } else {
    }
    %c0 = arith.constant 0 : index
    %c0_1 = arith.constant 0 : index
    %3 = vector.load %arg9[%c0, %c0_1] : memref<128x128xbf16, #tpu.memory_space<vmem>>, vector<128x128xbf16>
    %c0_2 = arith.constant 0 : index
    %c0_3 = arith.constant 0 : index
    %4 = vector.load %arg6[%c0_2, %c0_3] : memref<128x128xbf16, #tpu.memory_space<vmem>>, vector<128x128xbf16>
    %cst = arith.constant dense<0.000000e+00> : vector<128x128xf32>
    %5 = tpu.matmul %3, %4, %cst {dimension_numbers = #tpu.dot_dimension_numbers<[1], [0], [0], [1], [0, 0, 1, 1], [], []>} : vector<128x128xbf16>, vector<128x128xbf16>, vector<128x128xf32> -> vector<128x128xf32>
    %c0_4 = arith.constant 0 : index
    %c0_5 = arith.constant 0 : index
    %6 = vector.load %arg7[%c0_4, %c0_5] : memref<1x128xf32, #tpu.memory_space<vmem>>, vector<1x128xf32>
    %7 = vector.broadcast %6 : vector<1x128xf32> to vector<128x128xf32>
    %8 = arith.addf %5, %7 : vector<128x128xf32>
    %c0_6 = arith.constant 0 : index
    %c0_7 = arith.constant 0 : index
    %9 = vector.load %arg8[%c0_6, %c0_7] : memref<128x128xf32, #tpu.memory_space<vmem>>, vector<128x128xf32>
    tpu.vector_store %arg8[%c0_6, %c0_7], %8 {strides = array<i32>} : memref<128x128xf32, #tpu.memory_space<vmem>>, vector<128x128xf32>,
    return
  }
  func.func @transform_0(%arg0: i32, %arg1: i32) -> (i32, i32) {
    %c0_i32 = arith.constant 0 : i32
    %c0_i32_0 = arith.constant 0 : i32
    return %arg0, %c0_i32 : i32, i32
  }
  func.func @transform_1(%arg0: i32, %arg1: i32) -> (i32, i32) {
    %c0_i32 = arith.constant 0 : i32
    %c0_i32_0 = arith.constant 0 : i32
    return %arg0, %c0_i32 : i32, i32
  }
  func.func @transform_2(%arg0: i32, %arg1: i32) -> (i32, i32) {
    %c0_i32 = arith.constant 0 : i32
    %c0_i32_0 = arith.constant 0 : i32
    %c0_i32_1 = arith.constant 0 : i32
    return %c0_i32, %c0_i32_0 : i32, i32
  }
  func.func @transform_3(%arg0: i32, %arg1: i32) -> (i32, i32) {
    %c0_i32 = arith.constant 0 : i32
    %c0_i32_0 = arith.constant 0 : i32
    %c0_i32_1 = arith.constant 0 : i32
    return %c0_i32, %c0_i32_0 : i32, i32
  }
  func.func @transform_4(%arg0: i32, %arg1: i32) -> (i32, i32) {
    %c0_i32 = arith.constant 0 : i32
    %c0_i32_0 = arith.constant 0 : i32
    return %c0_i32, %arg1 : i32, i32
  }
  func.func @transform_5(%arg0: i32, %arg1: i32) -> (i32, i32) {
    %c0_i32 = arith.constant 0 : i32
    %c0_i32_0 = arith.constant 0 : i32
    return %c0_i32, %arg1 : i32, i32
  }
  func.func @transform_6(%arg0: i32, %arg1: i32) -> (i32, i32) {
    %c0_i32 = arith.constant 0 : i32
    return %arg0, %arg1 : i32, i32
  }
}

</mosaic_0001>

<llo_original>
// kernel: joint_forward.1
$region0: #{joint_forward.1}
  #allocation0 [shape = 'u32[]', space=smem, size = 0x4, offset = 0x4, fixed_abs, tag = 'smem constant byte address 0x4 - core index']
  #allocation1 [shape = 'u32[72,128]{1,0:T(1,128)}', space=vmem, size = 0x9000, scoped, tag = 'internal scratch']
  #allocation2 [shape = 'bf16[128,128]{1,0:T(8,128)(2,1)}', space=vmem, size = 0x8000, scoped, tag = 'scratch operand']
  %s0 = inlined_call_operand.hbm [shape: f32[128,32], index: 0, kind: input, shape index: {}]
  %s1 = inlined_call_operand.hbm [shape: f32[128,32], index: 1, kind: input, shape index: {}]
  %s2 = inlined_call_operand.hbm [shape: bf16[32,128], index: 2, kind: input, shape index: {}]
  %s3 = inlined_call_operand.vmem [shape: f32[1,128], index: 3, kind: input, shape index: {}]
  %s4 = inlined_call_operand.hbm [shape: bf16[128,128], index: 4, kind: input, shape index: {}]
  %s5 = inlined_call_operand.vmem [shape: f32[1,128], index: 5, kind: input, shape index: {}]
  %s6 = inlined_call_operand.hbm [shape: f32[128,128], index: 6, kind: output, shape index: {}]
  %s7 = sld [smem:[#allocation0]]
  $region54: #{joint_forward.1} parent=0
    _
  %s9 = ssub.s32 1, %s7
  %s10 = scalar_select 0, %s9, %s7
  $region1: #{joint_forward.1} parent=0
    #allocation3 [shape = 'u8[65536]{0}', space=vmem, size = 0x10000, scoped, tag = 'input window, operand 0, single buffered']
    #allocation4 [shape = 's32[1]{0}', space=sflag, size = 0x4, scoped, tag = 'scoped memory for joint_forward.1']
    #allocation5 [shape = 's32[1]{0}', space=sflag, size = 0x4, scoped, tag = 'scoped memory for joint_forward.1']
    #allocation6 [shape = 'u8[65536]{0}', space=vmem, size = 0x10000, scoped, tag = 'input window, operand 1, single buffered']
    #allocation7 [shape = 's32[1]{0}', space=sflag, size = 0x4, scoped, tag = 'scoped memory for joint_forward.1']
    #allocation8 [shape = 'u8[8192]{0}', space=vmem, size = 0x2000, scoped, tag = 'input window, operand 2, single buffered']
    #allocation9 [shape = 'u8[32768]{0}', space=vmem, size = 0x8000, scoped, tag = 'input window, operand 4, single buffered']
    #allocation10 [shape = 's32[1]{0}', space=sflag, size = 0x4, scoped, tag = 'scoped memory for joint_forward.1']
    #allocation11 [shape = 'u8[65536]{0}', space=vmem, size = 0x10000, scoped, tag = 'output window, operand 0, single buffered']
    %11 = vsyncpa [#allocation4], 0
    %12 = vsyncpa [#allocation7], 0
    %13 = vsyncpa [#allocation10], 0
    %14 = vsyncpa [#allocation5], 0
    // Predicated region
    $region2: #{joint_forward.1} parent=1 // pred_check
      _
    $region3: #{joint_forward.1} parent=1 // pred_check_branch
      %16 = sbr.rel (0) target = $region5
    $region4: #{joint_forward.1} parent=1 // pred_region
      %18 = vsyncadd [#allocation4], 0
      %s19 = sshll.u32 %s0, 4
      %s20 = int_to_ptr.hbm [resolvable:$true] %s19
      %s21 = sshll.u32 [#allocation3], 4
      %s22 = int_to_ptr.vmem [resolvable:$true] %s21
      %27 = dma.hbm_to_vmem [thread:$0]  %s20, 2048, %s22, [#allocation4], 128, 128, 8
    $region5: #{joint_forward.1} parent=1 // pred_fallthru
      _
    // Predicated region
    $region6: #{joint_forward.1} parent=1 // pred_check
      _
    $region7: #{joint_forward.1} parent=1 // pred_check_branch
      %29 = sbr.rel (0) target = $region9
    $region8: #{joint_forward.1} parent=1 // pred_region
      %31 = vsyncadd [#allocation7], 0
      %s32 = sshll.u32 %s1, 4
      %s33 = int_to_ptr.hbm [resolvable:$true] %s32
      %s34 = sshll.u32 [#allocation6], 4
      %s35 = int_to_ptr.vmem [resolvable:$true] %s34
      %40 = dma.hbm_to_vmem [thread:$0]  %s33, 2048, %s35, [#allocation7], 128, 128, 8
    $region9: #{joint_forward.1} parent=1 // pred_fallthru
      _
    // Predicated region
    $region10: #{joint_forward.1} parent=1 // pred_check
      _
    $region11: #{joint_forward.1} parent=1 // pred_check_branch
      %42 = sbr.rel (0) target = $region13
    $region12: #{joint_forward.1} parent=1 // pred_region
      %44 = vsyncadd [#allocation7], 0
      %s45 = sshll.u32 %s2, 4
      %s46 = int_to_ptr.hbm [resolvable:$true] %s45
      %s47 = sshll.u32 [#allocation8], 4
      %s48 = int_to_ptr.vmem [resolvable:$true] %s47
      %53 = dma.hbm_to_vmem [thread:$0]  %s46, 256, %s48, [#allocation7], 64, 64, 4
    $region13: #{joint_forward.1} parent=1 // pred_fallthru
      _
    // Predicated region
    $region14: #{joint_forward.1} parent=1 // pred_check
      _
    $region15: #{joint_forward.1} parent=1 // pred_check_branch
      %55 = sbr.rel (0) target = $region17
    $region16: #{joint_forward.1} parent=1 // pred_region
      _
    $region17: #{joint_forward.1} parent=1 // pred_fallthru
      _
    // Predicated region
    $region18: #{joint_forward.1} parent=1 // pred_check
      _
    $region19: #{joint_forward.1} parent=1 // pred_check_branch
      %57 = sbr.rel (0) target = $region21
    $region20: #{joint_forward.1} parent=1 // pred_region
      %59 = vsyncadd [#allocation10], 0
      %s60 = sshll.u32 %s4, 4
      %s61 = int_to_ptr.hbm [resolvable:$true] %s60
      %s62 = sshll.u32 [#allocation9], 4
      %s63 = int_to_ptr.vmem [resolvable:$true] %s62
      %68 = dma.hbm_to_vmem [thread:$0]  %s61, 1024, %s63, [#allocation10], 64, 64, 4
    $region21: #{joint_forward.1} parent=1 // pred_fallthru
      _
    // Predicated region
    $region22: #{joint_forward.1} parent=1 // pred_check
      _
    $region23: #{joint_forward.1} parent=1 // pred_check_branch
      %70 = sbr.rel (0) target = $region25
    $region24: #{joint_forward.1} parent=1 // pred_region
      _
    $region25: #{joint_forward.1} parent=1 // pred_fallthru
      _
    // Predicated region
    $region26: #{joint_forward.1} parent=1 // pred_check
      _
    $region27: #{joint_forward.1} parent=1 // pred_check_branch
      %72 = sbr.rel (0) target = $region29
    $region28: #{joint_forward.1} parent=1 // pred_region
      %74 = dma.done [#allocation4], 2048
    $region29: #{joint_forward.1} parent=1 // pred_fallthru
      _
    // Predicated region
    $region30: #{joint_forward.1} parent=1 // pred_check
      _
    $region31: #{joint_forward.1} parent=1 // pred_check_branch
      %76 = sbr.rel (0) target = $region33
    $region32: #{joint_forward.1} parent=1 // pred_region
      %78 = dma.done [#allocation7], 2048
    $region33: #{joint_forward.1} parent=1 // pred_fallthru
      _
    // Predicated region
    $region34: #{joint_forward.1} parent=1 // pred_check
      _
    $region35: #{joint_forward.1} parent=1 // pred_check_branch
      %80 = sbr.rel (0) target = $region37
    $region36: #{joint_forward.1} parent=1 // pred_region
      %82 = dma.done [#allocation7], 256
    $region37: #{joint_forward.1} parent=1 // pred_fallthru
      _
    // Predicated region
    $region38: #{joint_forward.1} parent=1 // pred_check
      _
    $region39: #{joint_forward.1} parent=1 // pred_check_branch
      %84 = sbr.rel (0) target = $region41
    $region40: #{joint_forward.1} parent=1 // pred_region
      %86 = dma.done [#allocation10], 1024
    $region41: #{joint_forward.1} parent=1 // pred_fallthru
      _
    %p88 = scmp.eq.s32.totalorder 0, 0
    // Predicated region
    $region42: #{joint_forward.1} parent=1 // pred_check
      %p89 = pneg %p88
    $region43: #{joint_forward.1} parent=1 // pred_check_branch
      %91 = sbr.rel (%p89) target = $region45
    $region44: #{joint_forward.1} parent=1 // pred_region
      %v92 = vld [vmem:[#allocation3] sm:$0xff]
      %v93 = vld [vmem:[#allocation3 + $0x8] sm:$0xff]
      %v94 = vld [vmem:[#allocation3 + $0x10] sm:$0xff]
      %v95 = vld [vmem:[#allocation3 + $0x18] sm:$0xff]
      %v96 = vld [vmem:[#allocation3 + $0x20] sm:$0xff]
      %v97 = vld [vmem:[#allocation3 + $0x28] sm:$0xff]
      %v98 = vld [vmem:[#allocation3 + $0x30] sm:$0xff]
      %v99 = vld [vmem:[#allocation3 + $0x38] sm:$0xff]
      %v100 = vld [vmem:[#allocation3 + $0x40] sm:$0xff]
      %v101 = vld [vmem:[#allocation3 + $0x48] sm:$0xff]
      %v102 = vld [vmem:[#allocation3 + $0x50] sm:$0xff]
      %v103 = vld [vmem:[#allocation3 + $0x58] sm:$0xff]
      %v104 = vld [vmem:[#allocation3 + $0x60] sm:$0xff]
      %v105 = vld [vmem:[#allocation3 + $0x68] sm:$0xff]
      %v106 = vld [vmem:[#allocation3 + $0x70] sm:$0xff]
      %v107 = vld [vmem:[#allocation3 + $0x78] sm:$0xff]
      %v108 = vld [vmem:[#allocation6] sm:$0xff]
      %v109 = vld [vmem:[#allocation6 + $0x8] sm:$0xff]
      %v110 = vld [vmem:[#allocation6 + $0x10] sm:$0xff]
      %v111 = vld [vmem:[#allocation6 + $0x18] sm:$0xff]
      %v112 = vld [vmem:[#allocation6 + $0x20] sm:$0xff]
      %v113 = vld [vmem:[#allocation6 + $0x28] sm:$0xff]
      %v114 = vld [vmem:[#allocation6 + $0x30] sm:$0xff]
      %v115 = vld [vmem:[#allocation6 + $0x38] sm:$0xff]
      %v116 = vld [vmem:[#allocation6 + $0x40] sm:$0xff]
      %v117 = vld [vmem:[#allocation6 + $0x48] sm:$0xff]
      %v118 = vld [vmem:[#allocation6 + $0x50] sm:$0xff]
      %v119 = vld [vmem:[#allocation6 + $0x58] sm:$0xff]
      %v120 = vld [vmem:[#allocation6 + $0x60] sm:$0xff]
      %v121 = vld [vmem:[#allocation6 + $0x68] sm:$0xff]
      %v122 = vld [vmem:[#allocation6 + $0x70] sm:$0xff]
      %v123 = vld [vmem:[#allocation6 + $0x78] sm:$0xff]
      %v124 = vadd.f32 %v92, %v108
      %v125 = vadd.f32 %v93, %v109
      %v126 = vadd.f32 %v94, %v110
      %v127 = vadd.f32 %v95, %v111
      %v128 = vadd.f32 %v96, %v112
      %v129 = vadd.f32 %v97, %v113
      %v130 = vadd.f32 %v98, %v114
      %v131 = vadd.f32 %v99, %v115
      %v132 = vadd.f32 %v100, %v116
      %v133 = vadd.f32 %v101, %v117
      %v134 = vadd.f32 %v102, %v118
      %v135 = vadd.f32 %v103, %v119
      %v136 = vadd.f32 %v104, %v120
      %v137 = vadd.f32 %v105, %v121
      %v138 = vadd.f32 %v106, %v122
      %v139 = vadd.f32 %v107, %v123
      %v140 = vpack.c.bf16 %v125, %v124
      %v141 = vpack.c.bf16 %v127, %v126
      %v142 = vpack.c.bf16 %v129, %v128
      %v143 = vpack.c.bf16 %v131, %v130
      %v144 = vpack.c.bf16 %v133, %v132
      %v145 = vpack.c.bf16 %v135, %v134
      %v146 = vpack.c.bf16 %v137, %v136
      %v147 = vpack.c.bf16 %v139, %v138
      %v148 = vld [vmem:[#allocation8] sm:$0xf]
      %v149 = vld [vmem:[#allocation8 + $0x4] sm:$0xf]
      %v150 = vld [vmem:[#allocation8 + $0x8] sm:$0xf]
      %v151 = vld [vmem:[#allocation8 + $0xc] sm:$0xf]
      %v152 = vld [vmem:[%s3] sm:$0x1]
      %v154 = vperm.slane %v152, 0
      %v160 = vunpack.c.l.b16 %v148
      %v161 = vunpack.c.l.b16 %v149
      %v162 = vunpack.c.l.b16 %v150
      %v163 = vunpack.c.l.b16 %v151
      %v164 = vpack.c.b16 %v161, %v160
      %v165 = vpack.c.b16 %v163, %v162
      %vm168 = vcmask 261120
      %v170 = vsel %vm168, %v140, 0
      %v173 = vsel %vm168, %v141, 0
      %v176 = vsel %vm168, %v142, 0
      %v179 = vsel %vm168, %v143, 0
      %v182 = vsel %vm168, %v144, 0
      %v185 = vsel %vm168, %v145, 0
      %v188 = vsel %vm168, %v146, 0
      %v191 = vsel %vm168, %v147, 0
      %193 = vmatpush.bf16.msra.mxu0 0
      %194 = vmatpush.bf16.msra.mxu0 0
      %195 = vmatpush.bf16.msra.mxu0 0
      %196 = vmatpush.bf16.msra.mxu0 0
      %197 = vmatpush.bf16.msra.mxu0 0
      %198 = vmatpush.bf16.msra.mxu0 0
      %199 = vmatpush.bf16.msra.mxu0 %v165
      %200 = vmatpush.bf16.msra.mxu0 %v164
      %201 = vmatmul.bf16.gmra.mxu0 %v170
      %v202 = vpop.f32.mrf.mxu0
      %v203 = vadd.f32 %v154, %v202
      %v204 = vpop.f32.mrf.mxu0
      %v205 = vadd.f32 %v154, %v204
      %206 = vmatmul.bf16.gmra.mxu0 %v173
      %v207 = vpop.f32.mrf.mxu0
      %v208 = vadd.f32 %v154, %v207
      %v209 = vpop.f32.mrf.mxu0
      %v210 = vadd.f32 %v154, %v209
      %211 = vmatmul.bf16.gmra.mxu0 %v176
      %v212 = vpop.f32.mrf.mxu0
      %v213 = vadd.f32 %v154, %v212
      %v214 = vpop.f32.mrf.mxu0
      %v215 = vadd.f32 %v154, %v214
      %216 = vmatmul.bf16.gmra.mxu0 %v179
      %v217 = vpop.f32.mrf.mxu0
      %v218 = vadd.f32 %v154, %v217
      %v219 = vpop.f32.mrf.mxu0
      %v220 = vadd.f32 %v154, %v219
      %221 = vmatmul.bf16.gmra.mxu0 %v182
      %v222 = vpop.f32.mrf.mxu0
      %v223 = vadd.f32 %v154, %v222
      %v224 = vpop.f32.mrf.mxu0
      %v225 = vadd.f32 %v154, %v224
      %226 = vmatmul.bf16.gmra.mxu0 %v185
      %v227 = vpop.f32.mrf.mxu0
      %v228 = vadd.f32 %v154, %v227
      %v229 = vpop.f32.mrf.mxu0
      %v230 = vadd.f32 %v154, %v229
      %231 = vmatmul.bf16.gmra.mxu0 %v188
      %v232 = vpop.f32.mrf.mxu0
      %v233 = vadd.f32 %v154, %v232
      %v234 = vpop.f32.mrf.mxu0
      %v235 = vadd.f32 %v154, %v234
      %236 = vmatmul.bf16.gmra.mxu0 %v191
      %v237 = vpop.f32.mrf.mxu0
      %v238 = vadd.f32 %v154, %v237
      %v239 = vpop.f32.mrf.mxu0
      %v240 = vadd.f32 %v154, %v239
      %241 = vdwg.mxu0
      %v242 = vtanh.pop %v203
      %v243 = vtanh.pop %v205
      %v244 = vtanh.pop %v208
      %v245 = vtanh.pop %v210
      %v246 = vtanh.pop %v213
      %v247 = vtanh.pop %v215
      %v248 = vtanh.pop %v218
      %v249 = vtanh.pop %v220
      %v250 = vtanh.pop %v223
      %v251 = vtanh.pop %v225
      %v252 = vtanh.pop %v228
      %v253 = vtanh.pop %v230
      %v254 = vtanh.pop %v233
      %v255 = vtanh.pop %v235
      %v256 = vtanh.pop %v238
      %v257 = vtanh.pop %v240
      %v258 = vpack.c.bf16 %v242, %v242
      %v259 = vpack.c.bf16 %v243, %v243
      %v260 = vpack.c.bf16 %v244, %v244
      %v261 = vpack.c.bf16 %v245, %v245
      %v262 = vpack.c.bf16 %v246, %v246
      %v263 = vpack.c.bf16 %v247, %v247
      %v264 = vpack.c.bf16 %v248, %v248
      %v265 = vpack.c.bf16 %v249, %v249
      %v266 = vpack.c.bf16 %v250, %v250
      %v267 = vpack.c.bf16 %v251, %v251
      %v268 = vpack.c.bf16 %v252, %v252
      %v269 = vpack.c.bf16 %v253, %v253
      %v270 = vpack.c.bf16 %v254, %v254
      %v271 = vpack.c.bf16 %v255, %v255
      %v272 = vpack.c.bf16 %v256, %v256
      %v273 = vpack.c.bf16 %v257, %v257
      %274 = vst [vmem:[#allocation2] sm:$0xf] %v258
      %275 = vst [vmem:[#allocation2 + $0x4] sm:$0xf] %v259
      %276 = vst [vmem:[#allocation2 + $0x8] sm:$0xf] %v260
      %277 = vst [vmem:[#allocation2 + $0xc] sm:$0xf] %v261
      %278 = vst [vmem:[#allocation2 + $0x10] sm:$0xf] %v262
      %279 = vst [vmem:[#allocation2 + $0x14] sm:$0xf] %v263
      %280 = vst [vmem:[#allocation2 + $0x18] sm:$0xf] %v264
      %281 = vst [vmem:[#allocation2 + $0x1c] sm:$0xf] %v265
      %282 = vst [vmem:[#allocation2 + $0x20] sm:$0xf] %v266
      %283 = vst [vmem:[#allocation2 + $0x24] sm:$0xf] %v267
      %284 = vst [vmem:[#allocation2 + $0x28] sm:$0xf] %v268
      %285 = vst [vmem:[#allocation2 + $0x2c] sm:$0xf] %v269
      %286 = vst [vmem:[#allocation2 + $0x30] sm:$0xf] %v270
      %287 = vst [vmem:[#allocation2 + $0x34] sm:$0xf] %v271
      %288 = vst [vmem:[#allocation2 + $0x38] sm:$0xf] %v272
      %289 = vst [vmem:[#allocation2 + $0x3c] sm:$0xf] %v273
    $region45: #{joint_forward.1} parent=1 // pred_fallthru
      _
    %v290 = vld [vmem:[#allocation2] sm:$0xf]
    %v291 = vld [vmem:[#allocation2 + $0x4] sm:$0xf]
    %v292 = vld [vmem:[#allocation2 + $0x8] sm:$0xf]
    %v293 = vld [vmem:[#allocation2 + $0xc] sm:$0xf]
    %v294 = vld [vmem:[#allocation2 + $0x10] sm:$0xf]
    %v295 = vld [vmem:[#allocation2 + $0x14] sm:$0xf]
    %v296 = vld [vmem:[#allocation2 + $0x18] sm:$0xf]
    %v297 = vld [vmem:[#allocation2 + $0x1c] sm:$0xf]
    %v298 = vld [vmem:[#allocation2 + $0x20] sm:$0xf]
    %v299 = vld [vmem:[#allocation2 + $0x24] sm:$0xf]
    %v300 = vld [vmem:[#allocation2 + $0x28] sm:$0xf]
    %v301 = vld [vmem:[#allocation2 + $0x2c] sm:$0xf]
    %v302 = vld [vmem:[#allocation2 + $0x30] sm:$0xf]
    %v303 = vld [vmem:[#allocation2 + $0x34] sm:$0xf]
    %v304 = vld [vmem:[#allocation2 + $0x38] sm:$0xf]
    %v305 = vld [vmem:[#allocation2 + $0x3c] sm:$0xf]
    %v306 = vld [vmem:[#allocation9] sm:$0xf]
    %v307 = vld [vmem:[#allocation9 + $0x4] sm:$0xf]
    %v308 = vld [vmem:[#allocation9 + $0x8] sm:$0xf]
    %v309 = vld [vmem:[#allocation9 + $0xc] sm:$0xf]
    %v310 = vld [vmem:[#allocation9 + $0x10] sm:$0xf]
    %v311 = vld [vmem:[#allocation9 + $0x14] sm:$0xf]
    %v312 = vld [vmem:[#allocation9 + $0x18] sm:$0xf]
    %v313 = vld [vmem:[#allocation9 + $0x1c] sm:$0xf]
    %v314 = vld [vmem:[#allocation9 + $0x20] sm:$0xf]
    %v315 = vld [vmem:[#allocation9 + $0x24] sm:$0xf]
    %v316 = vld [vmem:[#allocation9 + $0x28] sm:$0xf]
    %v317 = vld [vmem:[#allocation9 + $0x2c] sm:$0xf]
    %v318 = vld [vmem:[#allocation9 + $0x30] sm:$0xf]
    %v319 = vld [vmem:[#allocation9 + $0x34] sm:$0xf]
    %v320 = vld [vmem:[#allocation9 + $0x38] sm:$0xf]
    %v321 = vld [vmem:[#allocation9 + $0x3c] sm:$0xf]
    %v322 = vld [vmem:[%s5] sm:$0x1]
    %v324 = vperm.slane %v322, 0
    %v342 = vunpack.c.l.b16 %v290
    %v343 = vunpack.c.l.b16 %v291
    %v344 = vunpack.c.l.b16 %v292
    %v345 = vunpack.c.l.b16 %v293
    %v346 = vunpack.c.l.b16 %v294
    %v347 = vunpack.c.l.b16 %v295
    %v348 = vunpack.c.l.b16 %v296
    %v349 = vunpack.c.l.b16 %v297
    %v350 = vunpack.c.l.b16 %v298
    %v351 = vunpack.c.l.b16 %v299
    %v352 = vunpack.c.l.b16 %v300
    %v353 = vunpack.c.l.b16 %v301
    %v354 = vunpack.c.l.b16 %v302
    %v355 = vunpack.c.l.b16 %v303
    %v356 = vunpack.c.l.b16 %v304
    %v357 = vunpack.c.l.b16 %v305
    %v358 = vpack.c.b16 %v343, %v342
    %v359 = vpack.c.b16 %v345, %v344
    %v360 = vpack.c.b16 %v347, %v346
    %v361 = vpack.c.b16 %v349, %v348
    %v362 = vpack.c.b16 %v351, %v350
    %v363 = vpack.c.b16 %v353, %v352
    %v364 = vpack.c.b16 %v355, %v354
    %v365 = vpack.c.b16 %v357, %v356
    %v390 = vunpack.c.l.b16 %v306
    %v391 = vunpack.c.l.b16 %v307
    %v392 = vunpack.c.l.b16 %v308
    %v393 = vunpack.c.l.b16 %v309
    %v394 = vunpack.c.l.b16 %v310
    %v395 = vunpack.c.l.b16 %v311
    %v396 = vunpack.c.l.b16 %v312
    %v397 = vunpack.c.l.b16 %v313
    %v398 = vunpack.c.l.b16 %v314
    %v399 = vunpack.c.l.b16 %v315
    %v400 = vunpack.c.l.b16 %v316
    %v401 = vunpack.c.l.b16 %v317
    %v402 = vunpack.c.l.b16 %v318
    %v403 = vunpack.c.l.b16 %v319
    %v404 = vunpack.c.l.b16 %v320
    %v405 = vunpack.c.l.b16 %v321
    %v406 = vpack.c.b16 %v391, %v390
    %v407 = vpack.c.b16 %v393, %v392
    %v408 = vpack.c.b16 %v395, %v394
    %v409 = vpack.c.b16 %v397, %v396
    %v410 = vpack.c.b16 %v399, %v398
    %v411 = vpack.c.b16 %v401, %v400
    %v412 = vpack.c.b16 %v403, %v402
    %v413 = vpack.c.b16 %v405, %v404
    %422 = vmatpush.bf16.msra.mxu0 %v413
    %423 = vmatpush.bf16.msra.mxu0 %v412
    %424 = vmatpush.bf16.msra.mxu0 %v411
    %425 = vmatpush.bf16.msra.mxu0 %v410
    %426 = vmatpush.bf16.msra.mxu0 %v409
    %427 = vmatpush.bf16.msra.mxu0 %v408
    %428 = vmatpush.bf16.msra.mxu0 %v407
    %429 = vmatpush.bf16.msra.mxu0 %v406
    %430 = vmatmul.bf16.gmra.mxu0 %v358
    %v431 = vpop.f32.mrf.mxu0
    %v432 = vadd.f32 %v324, %v431
    %v433 = vpop.f32.mrf.mxu0
    %v434 = vadd.f32 %v324, %v433
    %435 = vmatmul.bf16.gmra.mxu0 %v359
    %v436 = vpop.f32.mrf.mxu0
    %v437 = vadd.f32 %v324, %v436
    %v438 = vpop.f32.mrf.mxu0
    %v439 = vadd.f32 %v324, %v438
    %440 = vmatmul.bf16.gmra.mxu0 %v360
    %v441 = vpop.f32.mrf.mxu0
    %v442 = vadd.f32 %v324, %v441
    %v443 = vpop.f32.mrf.mxu0
    %v444 = vadd.f32 %v324, %v443
    %445 = vmatmul.bf16.gmra.mxu0 %v361
    %v446 = vpop.f32.mrf.mxu0
    %v447 = vadd.f32 %v324, %v446
    %v448 = vpop.f32.mrf.mxu0
    %v449 = vadd.f32 %v324, %v448
    %450 = vmatmul.bf16.gmra.mxu0 %v362
    %v451 = vpop.f32.mrf.mxu0
    %v452 = vadd.f32 %v324, %v451
    %v453 = vpop.f32.mrf.mxu0
    %v454 = vadd.f32 %v324, %v453
    %455 = vmatmul.bf16.gmra.mxu0 %v363
    %v456 = vpop.f32.mrf.mxu0
    %v457 = vadd.f32 %v324, %v456
    %v458 = vpop.f32.mrf.mxu0
    %v459 = vadd.f32 %v324, %v458
    %460 = vmatmul.bf16.gmra.mxu0 %v364
    %v461 = vpop.f32.mrf.mxu0
    %v462 = vadd.f32 %v324, %v461
    %v463 = vpop.f32.mrf.mxu0
    %v464 = vadd.f32 %v324, %v463
    %465 = vmatmul.bf16.gmra.mxu0 %v365
    %v466 = vpop.f32.mrf.mxu0
    %v467 = vadd.f32 %v324, %v466
    %v468 = vpop.f32.mrf.mxu0
    %v469 = vadd.f32 %v324, %v468
    %470 = vdwg.mxu0
    %471 = vst [vmem:[#allocation11] sm:$0xff] %v432
    %472 = vst [vmem:[#allocation11 + $0x8] sm:$0xff] %v434
    %473 = vst [vmem:[#allocation11 + $0x10] sm:$0xff] %v437
    %474 = vst [vmem:[#allocation11 + $0x18] sm:$0xff] %v439
    %475 = vst [vmem:[#allocation11 + $0x20] sm:$0xff] %v442
    %476 = vst [vmem:[#allocation11 + $0x28] sm:$0xff] %v444
    %477 = vst [vmem:[#allocation11 + $0x30] sm:$0xff] %v447
    %478 = vst [vmem:[#allocation11 + $0x38] sm:$0xff] %v449
    %479 = vst [vmem:[#allocation11 + $0x40] sm:$0xff] %v452
    %480 = vst [vmem:[#allocation11 + $0x48] sm:$0xff] %v454
    %481 = vst [vmem:[#allocation11 + $0x50] sm:$0xff] %v457
    %482 = vst [vmem:[#allocation11 + $0x58] sm:$0xff] %v459
    %483 = vst [vmem:[#allocation11 + $0x60] sm:$0xff] %v462
    %484 = vst [vmem:[#allocation11 + $0x68] sm:$0xff] %v464
    %485 = vst [vmem:[#allocation11 + $0x70] sm:$0xff] %v467
    %486 = vst [vmem:[#allocation11 + $0x78] sm:$0xff] %v469
    // Predicated region
    $region46: #{joint_forward.1} parent=1 // pred_check
      _
    $region47: #{joint_forward.1} parent=1 // pred_check_branch
      %488 = sbr.rel (0) target = $region49
    $region48: #{joint_forward.1} parent=1 // pred_region
      %490 = vsyncadd [#allocation5], 0
      %s491 = sshll.u32 [#allocation11], 4
      %s492 = int_to_ptr.vmem [resolvable:$true] %s491
      %s493 = sshll.u32 %s6, 4
      %s494 = int_to_ptr.hbm [resolvable:$true] %s493
      %499 = dma.vmem_to_hbm [thread:$0]  %s492, 2048, %s494, [#allocation5], 128, 128, 8
    $region49: #{joint_forward.1} parent=1 // pred_fallthru
      _
    // Predicated region
    $region50: #{joint_forward.1} parent=1 // pred_check
      _
    $region51: #{joint_forward.1} parent=1 // pred_check_branch
      %501 = sbr.rel (0) target = $region53
    $region52: #{joint_forward.1} parent=1 // pred_region
      %503 = dma.done [#allocation5], 2048
    $region53: #{joint_forward.1} parent=1 // pred_fallthru
      _
    %504 = vsyncpa [#allocation4], 1
    %505 = vsyncpa [#allocation7], 1
    %506 = vsyncpa [#allocation10], 1
    %507 = vsyncpa [#allocation5], 1

</llo_original>
